<compile_context>
chip_gen: v5e
topology: v5e:2x2
jax: 0.10.0
libtpu: 0.0.40
codegen_flags: <defaults>
</compile_context>

<pallas_src>
import jax
import jax.numpy as jnp
from jax.experimental import pallas as pl
from jax.experimental.pallas import tpu as pltpu


_LANE = 128
_MAX_LANES = 4096                  # cap lane width at 32 vregs wide
_DEFAULT_BLOCK_BYTES = 4 << 20     # safe on v7x (64 MiB VMEM) with live double-buffers


def _block_budget_bytes():
    """Generation-aware per-block byte budget (~VMEM/16 => ~VMEM/4 live)."""
    try:
        info = pltpu.get_tpu_info()
        vmem = getattr(info, "vmem_capacity_bytes", None)
        if vmem:
            return max(1 << 20, min(vmem // 16, 16 << 20))
    except Exception:
        pass
    return _DEFAULT_BLOCK_BYTES


def _copy_kernel(x_ref, o_ref):
    # Identity copy of the current (block_rows, cols) tile.
    o_ref[...] = x_ref[...]


def _choose_layout(total, itemsize, budget):
    """Pick a lane-dense 2-D view (rows, cols) and a row-block size.

    Returns (rows, cols, block_rows), or None when the Pallas path does not
    apply (non-128-multiple sizes, zero-size, or no clean multiple-of-8
    row-blocking for the multi-block case).
    """
    if total == 0 or total % _LANE != 0:
        return None

    # Widest lane dimension (multiple of 128, <= _MAX_LANES) dividing total.
    # Prefer factorizations whose row count is a multiple of 8 so that vregs
    # are fully populated (sublane-dense as well as lane-dense).
    max_k = min(_MAX_LANES // _LANE, total // _LANE)
    widest = None          # widest cols dividing total
    widest_aligned = None  # widest cols dividing total with rows % 8 == 0
    for k in range(max_k, 0, -1):
        c = k * _LANE
        if total % c:
            continue
        if widest is None:
            widest = c
        if (total // c) % 8 == 0:
            widest_aligned = c
            break
    cols = widest_aligned if widest_aligned is not None else widest
    if cols is None:
        return None
    rows = total // cols
    row_bytes = cols * itemsize

    # Whole array fits one block -> single grid step, full-array block
    # (block shape == full array dims, so the (8,128) constraint is satisfied).
    if rows * row_bytes <= budget:
        return rows, cols, rows

    # Largest row-block that divides rows, is a multiple of 8, and fits budget.
    max_block_rows = max(8, (budget // row_bytes) // 8 * 8)
    d = min(max_block_rows, (rows // 8) * 8)
    while d >= 8:
        if rows % d == 0:
            return rows, cols, d
        d -= 8
    return None


def _flat_copy(flat, rows, cols, block_rows):
    """Copy the flat stream through a Pallas kernel as a (rows, cols) slab."""
    x2d = flat.reshape(rows, cols)
    grid = (rows // block_rows,)
    itemsize = jnp.dtype(flat.dtype).itemsize
    nbytes = rows * cols * itemsize
    block_bytes = block_rows * cols * itemsize
    vmem_limit = min(max(32 << 20, 6 * block_bytes), 64 << 20)

    out = pl.pallas_call(
        _copy_kernel,
        out_shape=jax.ShapeDtypeStruct((rows, cols), flat.dtype),
        grid=grid,
        in_specs=[pl.BlockSpec((block_rows, cols), lambda i: (i, 0))],
        out_specs=pl.BlockSpec((block_rows, cols), lambda i: (i, 0)),
        compiler_params=pltpu.CompilerParams(
            dimension_semantics=("parallel",),
            vmem_limit_bytes=vmem_limit,
        ),
        cost_estimate=pl.CostEstimate(
            flops=0, transcendentals=0, bytes_accessed=2 * nbytes),
    )(x2d)
    return out.reshape(-1)


class Reshape:
    """JAX/Pallas equivalent of the PyTorch Reshape(nn.Module)."""

    def __init__(self, *args):
        self.shape = args

    def __call__(self, x):
        x = jnp.asarray(x)
        total = int(x.size)
        itemsize = jnp.dtype(x.dtype).itemsize
        layout = _choose_layout(total, itemsize, _block_budget_bytes())
        if layout is None:
            # TODO(synk): non-lane-aligned / degenerate sizes skip the Pallas
            # copy; the metadata-only reshape is already exact (same values as
            # torch .view on a contiguous tensor).
            return x.reshape(self.shape)
        rows, cols, block_rows = layout
        # C-order flatten matches torch .view on contiguous tensors.
        flat = x.reshape(-1)
        out_flat = _flat_copy(flat, rows, cols, block_rows)
        return out_flat.reshape(self.shape)


if __name__ == "__main__":
    key = jax.random.PRNGKey(0)
    # Small shapes consistent with the module: x is (2, 4, 16, 16) NCHW,
    # reshaped to (2, 4, 256).
    x = jax.random.normal(key, (2, 4, 16, 16), dtype=jnp.float32)

    module = Reshape(2, 4, 256)
    out = module(x)
    out = jax.block_until_ready(out)

    # Correctness check against the pure-JAX reference of x.view(2, 4, 256).
    ref = x.reshape(2, 4, 256)
    assert out.shape == (2, 4, 256)
    assert out.dtype == x.dtype
    assert bool(jnp.array_equal(out, ref))

    print("KERNEL_OK")
</pallas_src>

<mosaic_0001>
module attributes {stable_mosaic.version = 11 : i64} {
  func.func @_copy_kernel(%arg0: i32, %arg1: memref<8x256xf32, #tpu.memory_space<vmem>>, %arg2: memref<8x256xf32, #tpu.memory_space<vmem>>) attributes {dimension_semantics = [#tpu.dimension_semantics<parallel>], iteration_bounds = array<i64: 1>, scalar_prefetch = 0 : i64, scratch_operands = 0 : i64, tpu.core_type = #tpu.core_type<tc>, window_params = [{transform_indices = @transform_0, window_bounds = array<i64: 8, 256>}, {transform_indices = @transform_1, window_bounds = array<i64: 8, 256>}]} {
    %c0 = arith.constant 0 : index
    %c0_0 = arith.constant 0 : index
    %0 = vector.load %arg1[%c0, %c0_0] : memref<8x256xf32, #tpu.memory_space<vmem>>, vector<8x256xf32>
    %c0_1 = arith.constant 0 : index
    %c0_2 = arith.constant 0 : index
    %1 = vector.load %arg2[%c0_1, %c0_2] : memref<8x256xf32, #tpu.memory_space<vmem>>, vector<8x256xf32>
    tpu.vector_store %arg2[%c0_1, %c0_2], %0 {strides = array<i32>} : memref<8x256xf32, #tpu.memory_space<vmem>>, vector<8x256xf32>,
    return
  }
  func.func @transform_0(%arg0: i32) -> (i32, i32) {
    %c0_i32 = arith.constant 0 : i32
    %c0_i32_0 = arith.constant 0 : i32
    return %arg0, %c0_i32 : i32, i32
  }
  func.func @transform_1(%arg0: i32) -> (i32, i32) {
    %c0_i32 = arith.constant 0 : i32
    %c0_i32_0 = arith.constant 0 : i32
    return %arg0, %c0_i32 : i32, i32
  }
}

</mosaic_0001>

<llo_original>
// kernel: tpu_custom_call.1
$region0: #{tpu_custom_call.1}
  #allocation0 [shape = 'u32[]', space=smem, size = 0x4, offset = 0x4, fixed_abs, tag = 'smem constant byte address 0x4 - core index']
  #allocation1 [shape = 'u32[72,128]{1,0:T(1,128)}', space=vmem, size = 0x9000, scoped, tag = 'internal scratch']
  %s0 = inlined_call_operand.hbm [shape: f32[8,256], index: 0, kind: input, shape index: {}]
  %s1 = inlined_call_operand.hbm [shape: f32[8,256], index: 1, kind: output, shape index: {}]
  %s2 = sld [smem:[#allocation0]]
  $region18: #{tpu_custom_call.1} parent=0
    _
  %s4 = ssub.s32 1, %s2
  %s5 = scalar_select 0, %s4, %s2
  $region1: #{tpu_custom_call.1} parent=0
    #allocation2 [shape = 'u8[8192]{0}', space=vmem, size = 0x2000, scoped, tag = 'input window, operand 0, single buffered']
    #allocation3 [shape = 's32[1]{0}', space=sflag, size = 0x4, scoped, tag = 'scoped memory for tpu_custom_call.1']
    #allocation4 [shape = 's32[1]{0}', space=sflag, size = 0x4, scoped, tag = 'scoped memory for tpu_custom_call.1']
    #allocation5 [shape = 'u8[8192]{0}', space=vmem, size = 0x2000, scoped, tag = 'output window, operand 0, single buffered']
    %6 = vsyncpa [#allocation3], 0
    %7 = vsyncpa [#allocation4], 0
    // Predicated region
    $region2: #{tpu_custom_call.1} parent=1 // pred_check
      _
    $region3: #{tpu_custom_call.1} parent=1 // pred_check_branch
      %9 = sbr.rel (0) target = $region5
    $region4: #{tpu_custom_call.1} parent=1 // pred_region
      %11 = vsyncadd [#allocation3], 0
      %s13 = sshll.u32 %s0, 4
      %s14 = int_to_ptr.hbm [resolvable:$true] %s13
      %s15 = sshll.u32 [#allocation2], 4
      %s16 = int_to_ptr.vmem [resolvable:$true] %s15
      %18 = dma.hbm_to_vmem [thread:$0]  %s14, 256, %s16, [#allocation3]
    $region5: #{tpu_custom_call.1} parent=1 // pred_fallthru
      _
    // Predicated region
    $region6: #{tpu_custom_call.1} parent=1 // pred_check
      _
    $region7: #{tpu_custom_call.1} parent=1 // pred_check_branch
      %20 = sbr.rel (0) target = $region9
    $region8: #{tpu_custom_call.1} parent=1 // pred_region
      %22 = dma.done [#allocation3], 256
    $region9: #{tpu_custom_call.1} parent=1 // pred_fallthru
      _
    %v23 = vld [vmem:[#allocation2] sm:$0xff]
    %v24 = vld [vmem:[#allocation2 + $0x8] sm:$0xff]
    %25 = vst [vmem:[#allocation5] sm:$0xff] %v23
    %26 = vst [vmem:[#allocation5 + $0x8] sm:$0xff] %v24
    // Predicated region
    $region10: #{tpu_custom_call.1} parent=1 // pred_check
      _
    $region11: #{tpu_custom_call.1} parent=1 // pred_check_branch
      %28 = sbr.rel (0) target = $region13
    $region12: #{tpu_custom_call.1} parent=1 // pred_region
      %30 = vsyncadd [#allocation4], 0
      %s32 = sshll.u32 [#allocation5], 4
      %s33 = int_to_ptr.vmem [resolvable:$true] %s32
      %s34 = sshll.u32 %s1, 4
      %s35 = int_to_ptr.hbm [resolvable:$true] %s34
      %37 = dma.vmem_to_hbm [thread:$0]  %s33, 256, %s35, [#allocation4]
    $region13: #{tpu_custom_call.1} parent=1 // pred_fallthru
      _
    // Predicated region
    $region14: #{tpu_custom_call.1} parent=1 // pred_check
      _
    $region15: #{tpu_custom_call.1} parent=1 // pred_check_branch
      %39 = sbr.rel (0) target = $region17
    $region16: #{tpu_custom_call.1} parent=1 // pred_region
      %41 = dma.done [#allocation4], 256
    $region17: #{tpu_custom_call.1} parent=1 // pred_fallthru
      _
    %42 = vsyncpa [#allocation3], 1
    %43 = vsyncpa [#allocation4], 1

</llo_original>
